<compile_context>
chip_gen: v5e
topology: v5e:2x2
jax: 0.10.0
libtpu: 0.0.40
codegen_flags: <defaults>
</compile_context>

<pallas_src>
import math

import jax
import jax.numpy as jnp
from jax import lax
from jax.experimental import pallas as pl
from jax.experimental.pallas import tpu as pltpu

GELU_C = math.sqrt(2.0 / math.pi)


def _round_up(x, m):
    return ((x + m - 1) // m) * m


def _pad2(a, rows, cols):
    pr, pc = rows - a.shape[0], cols - a.shape[1]
    if pr or pc:
        a = jnp.pad(a, ((0, pr), (0, pc)))
    return a


def _mlp_kernel(x_ref, wfc_ref, bfc_ref, wproj_ref, bproj_ref, o_ref, acc_ref):
    """Grid = (M tiles, H tiles); H (reduction) axis is last / 'arbitrary'.

    x_ref     : (tm, C)    current row tile (native dtype)
    wfc_ref   : (C, th)    H-slice of W_fc
    bfc_ref   : (1, th)    H-slice of b_fc
    wproj_ref : (th, C)    H-slice of W_proj
    bproj_ref : (1, C)     full c_proj bias
    o_ref     : (tm, C)    output tile
    acc_ref   : (tm, C) f32 accumulator (scratch, persists across H steps)
    """
    j = pl.program_id(1)

    # Fold the c_proj bias into the accumulator init (saves a (tm,C) VPU add).
    @pl.when(j == 0)
    def _():
        acc_ref[...] = jnp.broadcast_to(
            bproj_ref[...].astype(jnp.float32), acc_ref.shape)

    # c_fc slice: (tm, C) @ (C, th) -> f32 accumulation on the MXU, native
    # operand dtype (no f32 up-cast of the operands).
    h = jnp.dot(x_ref[...], wfc_ref[...],
                preferred_element_type=jnp.float32)
    h = h + bfc_ref[...].astype(jnp.float32)

    # new_gelu (tanh approximation), exactly as in the reference module. f32.
    g = 0.5 * h * (1.0 + jnp.tanh(GELU_C * (h + 0.044715 * h * h * h)))

    # Partial c_proj: (tm, th) @ (th, C), accumulated in f32.
    acc_ref[...] += jnp.dot(g.astype(wproj_ref.dtype), wproj_ref[...],
                            preferred_element_type=jnp.float32)

    # Write the output tile once the reduction over H is complete.
    @pl.when(j == pl.num_programs(1) - 1)
    def _():
        o_ref[...] = acc_ref[...].astype(o_ref.dtype)


def mlp_pallas(x2d, w_fc, b_fc, w_proj, b_proj, *, tm=256, th=512):
    """x2d: (M, C). w_fc: (C, H), b_fc: (1, H), w_proj: (H, C), b_proj: (1, C)."""
    M, C = x2d.shape
    Cw, H = w_fc.shape
    assert Cw == C and w_proj.shape == (H, C)
    assert b_fc.shape == (1, H) and b_proj.shape == (1, C)

    # Sublane multiple for the row tile: 8 for f32, 16 for bf16, ...
    sub = 8 * (4 // jnp.dtype(x2d.dtype).itemsize)

    # Clamp tile sizes to (padded) problem sizes, keep them HW-aligned.
    tm = max(sub, min(tm, _round_up(M, sub)))
    th = max(128, min(th, _round_up(H, 128)))

    Mp = _round_up(M, tm)          # padded token count
    Hp = _round_up(H, th)          # padded hidden dim (lane-dense slices)
    Cp = _round_up(C, 128)         # lane-dense embedding dim

    # Zero padding is exact: padded columns/rows contribute 0 through both
    # matmuls (gelu(0)*0-weights == 0) and padded outputs are sliced off.
    xp = _pad2(x2d, Mp, Cp)
    wfcp = _pad2(w_fc, Cp, Hp)
    bfcp = _pad2(b_fc, 1, Hp)
    wprojp = _pad2(w_proj, Hp, Cp)
    bprojp = _pad2(b_proj, 1, Cp)

    grid = (Mp // tm, Hp // th)

    itemsize = jnp.dtype(x2d.dtype).itemsize
    cost = pl.CostEstimate(
        flops=4 * Mp * Cp * Hp,                      # two matmuls
        transcendentals=Mp * Hp,                     # tanh in GELU
        bytes_accessed=(Mp * Cp * 2 + Cp * Hp + Hp * Cp + Hp + Cp) * itemsize,
    )

    out_p = pl.pallas_call(
        _mlp_kernel,
        out_shape=jax.ShapeDtypeStruct((Mp, Cp), x2d.dtype),
        grid_spec=pltpu.PrefetchScalarGridSpec(
            num_scalar_prefetch=0,
            grid=grid,
            in_specs=[
                pl.BlockSpec((tm, Cp), lambda i, j: (i, 0)),   # x row tile
                pl.BlockSpec((Cp, th), lambda i, j: (0, j)),   # W_fc H-slice
                pl.BlockSpec((1, th), lambda i, j: (0, j)),    # b_fc H-slice
                pl.BlockSpec((th, Cp), lambda i, j: (j, 0)),   # W_proj H-slice
                pl.BlockSpec((1, Cp), lambda i, j: (0, 0)),    # b_proj (full)
            ],
            out_specs=pl.BlockSpec((tm, Cp), lambda i, j: (i, 0)),
            scratch_shapes=[pltpu.VMEM((tm, Cp), jnp.float32)],
        ),
        compiler_params=pltpu.CompilerParams(
            dimension_semantics=("parallel", "arbitrary")),
        cost_estimate=cost,
    )(xp, wfcp, bfcp, wprojp, bprojp)

    return out_p[:M, :C]


def mlp_reference(x2d, w_fc, b_fc, w_proj, b_proj):
    hp = lax.Precision.HIGHEST
    h = jnp.dot(x2d, w_fc, precision=hp) + b_fc
    g = 0.5 * h * (1.0 + jnp.tanh(GELU_C * (h + 0.044715 * h ** 3)))
    return jnp.dot(g, w_proj, precision=hp) + b_proj


def _make_case(key, B, T, C):
    H = 4 * C
    kx, kw1, kb1, kw2, kb2 = jax.random.split(key, 5)
    x = jax.random.normal(kx, (B, T, C), dtype=jnp.float32)
    # PyTorch nn.Linear weights are (out, in); transpose into the kernel's
    # [in, out] layout. Deterministic scaled-normal init.
    w_fc_pt = jax.random.normal(kw1, (H, C), dtype=jnp.float32) / math.sqrt(C)
    b_fc_pt = jax.random.normal(kb1, (H,), dtype=jnp.float32) * 0.02
    w_proj_pt = jax.random.normal(kw2, (C, H), dtype=jnp.float32) / math.sqrt(H)
    b_proj_pt = jax.random.normal(kb2, (C,), dtype=jnp.float32) * 0.02
    return (x,
            w_fc_pt.T, b_fc_pt.reshape(1, H),
            w_proj_pt.T, b_proj_pt.reshape(1, C))


if __name__ == "__main__":
    key = jax.random.PRNGKey(0)
    k1, k2 = jax.random.split(key)

    # Case 1: lane-dense embedding (C=128), small batch/seq; th=256 forces a
    # 2-step reduction over the hidden dimension to exercise the accumulator.
    B, T, C = 2, 8, 128
    x, w_fc, b_fc, w_proj, b_proj = _make_case(k1, B, T, C)
    x2d = x.reshape(B * T, C)
    out = mlp_pallas(x2d, w_fc, b_fc, w_proj, b_proj, tm=256, th=256)
    out = out.reshape(B, T, C)
    jax.block_until_ready(out)
    ref = mlp_reference(x2d, w_fc, b_fc, w_proj, b_proj).reshape(B, T, C)
    assert jnp.allclose(out, ref, atol=1e-3, rtol=1e-3), "case 1 mismatch"

    # Case 2: non-lane-aligned width (C=32, like the module's toy config)
    # exercises the zero-padding path.
    B2, T2, C2 = 2, 8, 32
    x2, w_fc2, b_fc2, w_proj2, b_proj2 = _make_case(k2, B2, T2, C2)
    x2d2 = x2.reshape(B2 * T2, C2)
    out2 = mlp_pallas(x2d2, w_fc2, b_fc2, w_proj2, b_proj2)
    jax.block_until_ready(out2)
    ref2 = mlp_reference(x2d2, w_fc2, b_fc2, w_proj2, b_proj2)
    assert jnp.allclose(out2, ref2, atol=1e-3, rtol=1e-3), "case 2 mismatch"

    print("KERNEL_OK")
</pallas_src>

<mosaic_0001>
module attributes {stable_mosaic.version = 11 : i64} {
  func.func @_mlp_kernel(%arg0: i32, %arg1: i32, %arg2: memref<16x128xf32, #tpu.memory_space<vmem>>, %arg3: memref<128x256xf32, #tpu.memory_space<vmem>>, %arg4: memref<1x256xf32, #tpu.memory_space<vmem>>, %arg5: memref<256x128xf32, #tpu.memory_space<vmem>>, %arg6: memref<1x128xf32, #tpu.memory_space<vmem>>, %arg7: memref<16x128xf32, #tpu.memory_space<vmem>>, %arg8: memref<16x128xf32, #tpu.memory_space<vmem>>) attributes {dimension_semantics = [#tpu.dimension_semantics<parallel>, #tpu.dimension_semantics<arbitrary>], iteration_bounds = array<i64: 1, 2>, scalar_prefetch = 0 : i64, scratch_operands = 1 : i64, tpu.core_type = #tpu.core_type<tc>, window_params = [{transform_indices = @transform_0, window_bounds = array<i64: 16, 128>}, {transform_indices = @transform_1, window_bounds = array<i64: 128, 256>}, {transform_indices = @transform_2, window_bounds = array<i64: 1, 256>}, {transform_indices = @transform_3, window_bounds = array<i64: 256, 128>}, {pipeline_mode = #tpu.pipeline_mode<synchronous>, transform_indices = @transform_4, window_bounds = array<i64: 1, 128>}, {transform_indices = @transform_5, window_bounds = array<i64: 16, 128>}]} {
    %c0_i32 = arith.constant 0 : i32
    %0 = arith.cmpi eq, %arg1, %c0_i32 : i32
    %1 = arith.extui %0 : i1 to i32
    %c0_i32_0 = arith.constant 0 : i32
    %2 = arith.cmpi ne, %1, %c0_i32_0 : i32
    scf.if %2 {
      %c0_18 = arith.constant 0 : index
      %c0_19 = arith.constant 0 : index
      %30 = vector.load %arg6[%c0_18, %c0_19] : memref<1x128xf32, #tpu.memory_space<vmem>>, vector<1x128xf32>
      %31 = vector.shape_cast %30 : vector<1x128xf32> to vector<1x128xf32>
      %32 = vector.broadcast %31 : vector<1x128xf32> to vector<16x128xf32>
      %c0_20 = arith.constant 0 : index
      %c0_21 = arith.constant 0 : index
      %33 = vector.load %arg8[%c0_20, %c0_21] : memref<16x128xf32, #tpu.memory_space<vmem>>, vector<16x128xf32>
      tpu.vector_store %arg8[%c0_20, %c0_21], %32 {strides = array<i32>} : memref<16x128xf32, #tpu.memory_space<vmem>>, vector<16x128xf32>,
    } else {
    }
    %c0 = arith.constant 0 : index
    %c0_1 = arith.constant 0 : index
    %3 = vector.load %arg2[%c0, %c0_1] : memref<16x128xf32, #tpu.memory_space<vmem>>, vector<16x128xf32>
    %c0_2 = arith.constant 0 : index
    %c0_3 = arith.constant 0 : index
    %4 = vector.load %arg3[%c0_2, %c0_3] : memref<128x256xf32, #tpu.memory_space<vmem>>, vector<128x256xf32>
    %cst = arith.constant dense<0.000000e+00> : vector<16x256xf32>
    %5 = tpu.matmul %3, %4, %cst {dimension_numbers = #tpu.dot_dimension_numbers<[1], [0], [0], [1], [0, 0, 1, 1], [], []>} : vector<16x128xf32>, vector<128x256xf32>, vector<16x256xf32> -> vector<16x256xf32>
    %c0_4 = arith.constant 0 : index
    %c0_5 = arith.constant 0 : index
    %6 = vector.load %arg4[%c0_4, %c0_5] : memref<1x256xf32, #tpu.memory_space<vmem>>, vector<1x256xf32>
    %7 = vector.broadcast %6 : vector<1x256xf32> to vector<16x256xf32>
    %8 = arith.addf %5, %7 : vector<16x256xf32>
    %cst_6 = arith.constant 5.000000e-01 : f32
    %9 = vector.broadcast %cst_6 : f32 to vector<16x256xf32>
    %10 = arith.mulf %9, %8 : vector<16x256xf32>
    %cst_7 = arith.constant 4.471500e-02 : f32
    %11 = vector.broadcast %cst_7 : f32 to vector<16x256xf32>
    %12 = arith.mulf %11, %8 : vector<16x256xf32>
    %13 = arith.mulf %12, %8 : vector<16x256xf32>
    %14 = arith.mulf %13, %8 : vector<16x256xf32>
    %15 = arith.addf %8, %14 : vector<16x256xf32>
    %cst_8 = arith.constant 0.797884583 : f32
    %16 = vector.broadcast %cst_8 : f32 to vector<16x256xf32>
    %17 = arith.mulf %16, %15 : vector<16x256xf32>
    %18 = math.tanh %17 : vector<16x256xf32>
    %cst_9 = arith.constant 1.000000e+00 : f32
    %19 = vector.broadcast %cst_9 : f32 to vector<16x256xf32>
    %20 = arith.addf %19, %18 : vector<16x256xf32>
    %21 = arith.mulf %10, %20 : vector<16x256xf32>
    %c0_10 = arith.constant 0 : index
    %c0_11 = arith.constant 0 : index
    %22 = vector.load %arg8[%c0_10, %c0_11] : memref<16x128xf32, #tpu.memory_space<vmem>>, vector<16x128xf32>
    %c0_12 = arith.constant 0 : index
    %c0_13 = arith.constant 0 : index
    %23 = vector.load %arg5[%c0_12, %c0_13] : memref<256x128xf32, #tpu.memory_space<vmem>>, vector<256x128xf32>
    %cst_14 = arith.constant dense<0.000000e+00> : vector<16x128xf32>
    %24 = tpu.matmul %21, %23, %cst_14 {dimension_numbers = #tpu.dot_dimension_numbers<[1], [0], [0], [1], [0, 0, 1, 1], [], []>} : vector<16x256xf32>, vector<256x128xf32>, vector<16x128xf32> -> vector<16x128xf32>
    %25 = arith.addf %22, %24 : vector<16x128xf32>
    %c0_15 = arith.constant 0 : index
    %c0_16 = arith.constant 0 : index
    %26 = vector.load %arg8[%c0_15, %c0_16] : memref<16x128xf32, #tpu.memory_space<vmem>>, vector<16x128xf32>
    tpu.vector_store %arg8[%c0_15, %c0_16], %25 {strides = array<i32>} : memref<16x128xf32, #tpu.memory_space<vmem>>, vector<16x128xf32>,
    %c1_i32 = arith.constant 1 : i32
    %27 = arith.cmpi eq, %arg1, %c1_i32 : i32
    %28 = arith.extui %27 : i1 to i32
    %c0_i32_17 = arith.constant 0 : i32
    %29 = arith.cmpi ne, %28, %c0_i32_17 : i32
    scf.if %29 {
      %c0_18 = arith.constant 0 : index
      %c0_19 = arith.constant 0 : index
      %30 = vector.load %arg8[%c0_18, %c0_19] : memref<16x128xf32, #tpu.memory_space<vmem>>, vector<16x128xf32>
      %c0_20 = arith.constant 0 : index
      %c0_21 = arith.constant 0 : index
      %31 = vector.load %arg7[%c0_20, %c0_21] : memref<16x128xf32, #tpu.memory_space<vmem>>, vector<16x128xf32>
      tpu.vector_store %arg7[%c0_20, %c0_21], %30 {strides = array<i32>} : memref<16x128xf32, #tpu.memory_space<vmem>>, vector<16x128xf32>,
    } else {
    }
    return
  }
  func.func @transform_0(%arg0: i32, %arg1: i32) -> (i32, i32) {
    %c0_i32 = arith.constant 0 : i32
    %c0_i32_0 = arith.constant 0 : i32
    return %arg0, %c0_i32 : i32, i32
  }
  func.func @transform_1(%arg0: i32, %arg1: i32) -> (i32, i32) {
    %c0_i32 = arith.constant 0 : i32
    %c0_i32_0 = arith.constant 0 : i32
    return %c0_i32, %arg1 : i32, i32
  }
  func.func @transform_2(%arg0: i32, %arg1: i32) -> (i32, i32) {
    %c0_i32 = arith.constant 0 : i32
    %c0_i32_0 = arith.constant 0 : i32
    return %c0_i32, %arg1 : i32, i32
  }
  func.func @transform_3(%arg0: i32, %arg1: i32) -> (i32, i32) {
    %c0_i32 = arith.constant 0 : i32
    %c0_i32_0 = arith.constant 0 : i32
    return %arg1, %c0_i32 : i32, i32
  }
  func.func @transform_4(%arg0: i32, %arg1: i32) -> (i32, i32) {
    %c0_i32 = arith.constant 0 : i32
    %c0_i32_0 = arith.constant 0 : i32
    %c0_i32_1 = arith.constant 0 : i32
    return %c0_i32, %c0_i32_0 : i32, i32
  }
  func.func @transform_5(%arg0: i32, %arg1: i32) -> (i32, i32) {
    %c0_i32 = arith.constant 0 : i32
    %c0_i32_0 = arith.constant 0 : i32
    return %arg0, %c0_i32 : i32, i32
  }
}

</mosaic_0001>

<llo_original>
// kernel: tpu_custom_call.1
$region0: #{tpu_custom_call.1}
  #allocation0 [shape = 'u32[]', space=smem, size = 0x4, offset = 0x4, fixed_abs, tag = 'smem constant byte address 0x4 - core index']
  #allocation1 [shape = 'u32[72,128]{1,0:T(1,128)}', space=vmem, size = 0x9000, scoped, tag = 'internal scratch']
  #allocation2 [shape = 'f32[16,128]{1,0:T(8,128)}', space=vmem, size = 0x2000, scoped, tag = 'scratch operand']
  %s0 = inlined_call_operand.hbm [shape: f32[16,128], index: 0, kind: input, shape index: {}]
  %s1 = inlined_call_operand.hbm [shape: f32[128,512], index: 1, kind: input, shape index: {}]
  %s2 = inlined_call_operand.hbm [shape: f32[1,512], index: 2, kind: input, shape index: {}]
  %s3 = inlined_call_operand.hbm [shape: f32[512,128], index: 3, kind: input, shape index: {}]
  %s4 = inlined_call_operand.vmem [shape: f32[1,128], index: 4, kind: input, shape index: {}]
  %s5 = inlined_call_operand.hbm [shape: f32[16,128], index: 5, kind: output, shape index: {}]
  %s6 = sld [smem:[#allocation0]]
  $region77: #{tpu_custom_call.1} parent=0
    _
  %s8 = ssub.s32 1, %s6
  %s9 = scalar_select 0, %s8, %s6
  $region1: #{tpu_custom_call.1} parent=0
    #allocation3 [shape = 'u8[8192]{0}', space=vmem, size = 0x2000, scoped, tag = 'input window, operand 0, single buffered']
    #allocation4 [shape = 's32[2]{0}', space=sflag, size = 0x8, scoped, tag = 'scoped memory for tpu_custom_call.1']
    #allocation5 [shape = 's32[2]{0}', space=sflag, size = 0x8, scoped, tag = 'scoped memory for tpu_custom_call.1']
    #allocation6 [shape = 'u8[262144]{0}', space=vmem, size = 0x40000, scoped, tag = 'input window, operand 1']
    #allocation7 [shape = 's32[2]{0}', space=sflag, size = 0x8, scoped, tag = 'scoped memory for tpu_custom_call.1']
    #allocation8 [shape = 'u8[2048]{0}', space=vmem, size = 0x800, scoped, tag = 'input window, operand 2']
    #allocation9 [shape = 'u8[262144]{0}', space=vmem, size = 0x40000, scoped, tag = 'input window, operand 3']
    #allocation10 [shape = 's32[2]{0}', space=sflag, size = 0x8, scoped, tag = 'scoped memory for tpu_custom_call.1']
    #allocation11 [shape = 'u8[8192]{0}', space=vmem, size = 0x2000, scoped, tag = 'output window, operand 0, single buffered']
    %10 = vsyncpa [#allocation4], 0
    %11 = vsyncpa [#allocation7], 0
    %s12 = scalar_lea.sflag [#allocation7], 1
    %13 = vsyncpa %s12, 0
    %14 = vsyncpa [#allocation10], 0
    %s15 = scalar_lea.sflag [#allocation10], 1
    %16 = vsyncpa %s15, 0
    %17 = vsyncpa [#allocation5], 0
    loop: start=0, step=1, limit=4
    $region2: #{tpu_custom_call.1} parent=1 // loop_pre_header
      _
    $region3: #{tpu_custom_call.1} parent=1 // loop_header
      %s19 = sphi 0, %s23
      %p20 = scmp.ge.s32.totalorder %s19, 4
      %s26 = sphi 0, %s38
      %s27 = sphi 0, %s34
      %s28 = sphi 0, %s26
      %s29 = sphi 0, %s27
      %s30 = sphi 0, %s28
      %s31 = sphi 0, %s29
      %s41 = sphi 0, %s43
      %s44 = sphi 0, %s41
      %s45 = sphi 0, %s44
      %s61 = sphi 0, %s45
      %s67 = sphi 0, %s69
      %s70 = sphi 0, %s67
      %s71 = sphi 0, %s70
      %s87 = sphi 0, %s71
      %s93 = sphi 0, %s95
      %s96 = sphi 0, %s93
      %s97 = sphi 0, %s96
      %s113 = sphi 0, %s97
      %s119 = sphi 0, %s121
      %s122 = sphi 0, %s119
      %s123 = sphi 0, %s122
      %s139 = sphi 0, %s123
      %s143 = sphi 0, %s143
      %s145 = sphi 0, %s143
      %s146 = sphi 0, %s145
      %s160 = sphi 0, %s146
      %s166 = sphi 0, %s168
      %s169 = sphi 0, %s166
      %s170 = sphi 0, %s169
      %s186 = sphi 0, %s170
    $region4: #{tpu_custom_call.1} parent=1 // loop_header_branch
      %22 = sbr.rel (%p20) target = $region8
    $region5: #{tpu_custom_call.1} parent=1 // loop_body
      %s24 = ssub.s32 %s19, 1
      %s25 = ssub.s32 %s19, 2
      %s32 = sadd.s32 1, %s27
      %p33 = scmp.ge.s32.totalorder %s32, 2
      %s34 = scalar_select %p33, 0, %s32
      %s35 = sadd.s32 1, %s26
      %s36 = scalar_select %p33, %s35, %s26
      %p37 = scmp.ge.s32.totalorder %s36, 1
      %s38 = scalar_select %p37, 0, %s36
      %s39 = ssub.s32 %s26, %s38
      %p40 = scmp.eq.s32.totalorder %s39, 0
      %s42 = sadd.s32 %s41, 1
      %s43 = scalar_select %p40, %s41, %s42
      %p46 = pneg %p40
      %p47 = scmp.eq.s32.totalorder %s19, 1
      %p48 = por %p46, %p47
      %p49 = scmp.ne.s32.totalorder %s41, %s44
      %p50 = scmp.eq.s32.totalorder %s19, 0
      %p51 = por %p49, %p50
      %p52 = scmp.ne.s32.totalorder %s41, %s44
      %p53 = scmp.eq.s32.totalorder %s24, 1
      %p54 = por %p52, %p53
      %p55 = scmp.ne.s32.totalorder %s44, %s45
      %p56 = scmp.eq.s32.totalorder %s24, 0
      %p57 = por %p55, %p56
      %p58 = scmp.ne.s32.totalorder %s44, %s45
      %p59 = scmp.eq.s32.totalorder %s25, 1
      %p60 = por %p58, %p59
      %p62 = scmp.ne.s32.totalorder %s45, %s61
      %p63 = scmp.eq.s32.totalorder %s25, 0
      %p64 = por %p62, %p63
      %s65 = ssub.s32 %s27, %s34
      %p66 = scmp.eq.s32.totalorder %s65, 0
      %s68 = sadd.s32 %s67, 1
      %s69 = scalar_select %p66, %s67, %s68
      %p72 = pneg %p66
      %p73 = scmp.eq.s32.totalorder %s19, 1
      %p74 = por %p72, %p73
      %p75 = scmp.ne.s32.totalorder %s67, %s70
      %p76 = scmp.eq.s32.totalorder %s19, 0
      %p77 = por %p75, %p76
      %p78 = scmp.ne.s32.totalorder %s67, %s70
      %p79 = scmp.eq.s32.totalorder %s24, 1
      %p80 = por %p78, %p79
      %p81 = scmp.ne.s32.totalorder %s70, %s71
      %p82 = scmp.eq.s32.totalorder %s24, 0
      %p83 = por %p81, %p82
      %p84 = scmp.ne.s32.totalorder %s70, %s71
      %p85 = scmp.eq.s32.totalorder %s25, 1
      %p86 = por %p84, %p85
      %p88 = scmp.ne.s32.totalorder %s71, %s87
      %p89 = scmp.eq.s32.totalorder %s25, 0
      %p90 = por %p88, %p89
      %s91 = ssub.s32 %s27, %s34
      %p92 = scmp.eq.s32.totalorder %s91, 0
      %s94 = sadd.s32 %s93, 1
      %s95 = scalar_select %p92, %s93, %s94
      %p98 = pneg %p92
      %p99 = scmp.eq.s32.totalorder %s19, 1
      %p100 = por %p98, %p99
      %p101 = scmp.ne.s32.totalorder %s93, %s96
      %p102 = scmp.eq.s32.totalorder %s19, 0
      %p103 = por %p101, %p102
      %p104 = scmp.ne.s32.totalorder %s93, %s96
      %p105 = scmp.eq.s32.totalorder %s24, 1
      %p106 = por %p104, %p105
      %p107 = scmp.ne.s32.totalorder %s96, %s97
      %p108 = scmp.eq.s32.totalorder %s24, 0
      %p109 = por %p107, %p108
      %p110 = scmp.ne.s32.totalorder %s96, %s97
      %p111 = scmp.eq.s32.totalorder %s25, 1
      %p112 = por %p110, %p111
      %p114 = scmp.ne.s32.totalorder %s97, %s113
      %p115 = scmp.eq.s32.totalorder %s25, 0
      %p116 = por %p114, %p115
      %s117 = ssub.s32 %s27, %s34
      %p118 = scmp.eq.s32.totalorder %s117, 0
      %s120 = sadd.s32 %s119, 1
      %s121 = scalar_select %p118, %s119, %s120
      %p124 = pneg %p118
      %p125 = scmp.eq.s32.totalorder %s19, 1
      %p126 = por %p124, %p125
      %p127 = scmp.ne.s32.totalorder %s119, %s122
      %p128 = scmp.eq.s32.totalorder %s19, 0
      %p129 = por %p127, %p128
      %p130 = scmp.ne.s32.totalorder %s119, %s122
      %p131 = scmp.eq.s32.totalorder %s24, 1
      %p132 = por %p130, %p131
      %p133 = scmp.ne.s32.totalorder %s122, %s123
      %p134 = scmp.eq.s32.totalorder %s24, 0
      %p135 = por %p133, %p134
      %p136 = scmp.ne.s32.totalorder %s122, %s123
      %p137 = scmp.eq.s32.totalorder %s25, 1
      %p138 = por %p136, %p137
      %p140 = scmp.ne.s32.totalorder %s123, %s139
      %p141 = scmp.eq.s32.totalorder %s25, 0
      %p142 = por %p140, %p141
      %s144 = sadd.s32 %s143, 1
      %p147 = scmp.eq.s32.totalorder %s19, 1
      %p148 = scmp.ne.s32.totalorder %s143, %s145
      %p149 = scmp.eq.s32.totalorder %s19, 0
      %p150 = por %p148, %p149
      %p151 = scmp.ne.s32.totalorder %s143, %s145
      %p152 = scmp.eq.s32.totalorder %s24, 1
      %p153 = por %p151, %p152
      %p154 = scmp.ne.s32.totalorder %s145, %s146
      %p155 = scmp.eq.s32.totalorder %s24, 0
      %p156 = por %p154, %p155
      %p157 = scmp.ne.s32.totalorder %s145, %s146
      %p158 = scmp.eq.s32.totalorder %s25, 1
      %p159 = por %p157, %p158
      %p161 = scmp.ne.s32.totalorder %s146, %s160
      %p162 = scmp.eq.s32.totalorder %s25, 0
      %p163 = por %p161, %p162
      %s164 = ssub.s32 %s26, %s38
      %p165 = scmp.eq.s32.totalorder %s164, 0
      %s167 = sadd.s32 %s166, 1
      %s168 = scalar_select %p165, %s166, %s167
      %p171 = pneg %p165
      %p172 = scmp.eq.s32.totalorder %s19, 1
      %p173 = por %p171, %p172
      %p174 = scmp.ne.s32.totalorder %s166, %s169
      %p175 = scmp.eq.s32.totalorder %s19, 0
      %p176 = por %p174, %p175
      %p177 = scmp.ne.s32.totalorder %s166, %s169
      %p178 = scmp.eq.s32.totalorder %s24, 1
      %p179 = por %p177, %p178
      %p180 = scmp.ne.s32.totalorder %s169, %s170
      %p181 = scmp.eq.s32.totalorder %s24, 0
      %p182 = por %p180, %p181
      %p183 = scmp.ne.s32.totalorder %s169, %s170
      %p184 = scmp.eq.s32.totalorder %s25, 1
      %p185 = por %p183, %p184
      %p187 = scmp.ne.s32.totalorder %s170, %s186
      %p188 = scmp.eq.s32.totalorder %s25, 0
      %p189 = por %p187, %p188
      %p190 = scmp.le.s32.totalorder 1, %s19
      %p191 = scmp.lt.s32.totalorder %s19, 3
      %p192 = pnand %p190, %p191
      %p193 = pneg %p192
      // Predicated region
      $region9: #{tpu_custom_call.1} parent=5 // pred_check
        _
      $region10: #{tpu_custom_call.1} parent=5 // pred_check_branch
        %195 = sbr.rel (%p192) target = $region12
      $region11: #{tpu_custom_call.1} parent=5 // pred_region
        %s196 = ssub.s32 %s19, 1
        // Predicated region
        $region13: #{tpu_custom_call.1} parent=11 // pred_check
          %p197 = pneg %p57
        $region14: #{tpu_custom_call.1} parent=11 // pred_check_branch
          %199 = sbr.rel (%p197) target = $region16
        $region15: #{tpu_custom_call.1} parent=11 // pred_region
          %s200 = smul.u32 2, %s28
          %202 = vsyncadd [#allocation4], 0
          %s203 = smul.addr %s200, 8
          %s204 = scalar_lea.hbm %s0, %s203
          %s205 = sshll.u32 %s204, 4
          %s206 = int_to_ptr.hbm [resolvable:$true] %s205
          %s207 = sshll.u32 [#allocation3], 4
          %s208 = int_to_ptr.vmem [resolvable:$true] %s207
          %213 = dma.hbm_to_vmem [thread:$0]  %s206, 256, %s208, [#allocation4], 128, 128, 8
        $region16: #{tpu_custom_call.1} parent=11 // pred_fallthru
          _
        // Predicated region
        $region17: #{tpu_custom_call.1} parent=11 // pred_check
          %p214 = pneg %p156
        $region18: #{tpu_custom_call.1} parent=11 // pred_check_branch
          %216 = sbr.rel (%p214) target = $region20
        $region19: #{tpu_custom_call.1} parent=11 // pred_region
          _
        $region20: #{tpu_custom_call.1} parent=11 // pred_fallthru
          _
      $region12: #{tpu_custom_call.1} parent=5 // pred_fallthru
        _
      %p217 = scmp.lt.s32.totalorder %s19, 2
      // Predicated region
      $region21: #{tpu_custom_call.1} parent=5 // pred_check
        %p218 = pneg %p217
      $region22: #{tpu_custom_call.1} parent=5 // pred_check_branch
        %220 = sbr.rel (%p218) target = $region24
      $region23: #{tpu_custom_call.1} parent=5 // pred_region
        // Predicated region
        $region25: #{tpu_custom_call.1} parent=23 // pred_check
          %p221 = pneg %p77
        $region26: #{tpu_custom_call.1} parent=23 // pred_check_branch
          %223 = sbr.rel (%p221) target = $region28
        $region27: #{tpu_custom_call.1} parent=23 // pred_region
          %s224 = sand.u32 %s19, 1
          %s225 = scalar_lea.sflag [#allocation7], %s224
          %s226 = sand.u32 %s67, 1
          %s227 = smul.addr %s226, 256
          %s228 = scalar_lea.vmem [#allocation6], %s227
          %s229 = smul.u32 2, %s27
          %231 = vsyncadd %s225, 0
          %s232 = smul.addr %s229, 8
          %s233 = scalar_lea.hbm %s1, %s232
          %s234 = sshll.u32 %s233, 4
          %s235 = int_to_ptr.hbm [resolvable:$true] %s234
          %s236 = sshll.u32 %s228, 4
          %s237 = int_to_ptr.vmem [resolvable:$true] %s236
          %242 = dma.hbm_to_vmem [thread:$0]  %s235, 4096, %s237, %s225, 512, 256, 16
        $region28: #{tpu_custom_call.1} parent=23 // pred_fallthru
          _
        // Predicated region
        $region29: #{tpu_custom_call.1} parent=23 // pred_check
          %p243 = pneg %p103
        $region30: #{tpu_custom_call.1} parent=23 // pred_check_branch
          %245 = sbr.rel (%p243) target = $region32
        $region31: #{tpu_custom_call.1} parent=23 // pred_region
          %s246 = sand.u32 %s19, 1
          %s247 = scalar_lea.sflag [#allocation7], %s246
          %s248 = sand.u32 %s93, 1
          %s249 = smul.addr %s248, 2
          %s250 = scalar_lea.vmem [#allocation8], %s249
          %s251 = smul.u32 2, %s27
          %253 = vsyncadd %s247, 0
          %s254 = scalar_lea.hbm %s2, %s251
          %s256 = sshll.u32 %s254, 4
          %s257 = int_to_ptr.hbm [resolvable:$true] %s256
          %s258 = sshll.u32 %s250, 4
          %s259 = int_to_ptr.vmem [resolvable:$true] %s258
          %261 = dma.hbm_to_vmem [thread:$0]  %s257, 32, %s259, %s247
        $region32: #{tpu_custom_call.1} parent=23 // pred_fallthru
          _
        // Predicated region
        $region33: #{tpu_custom_call.1} parent=23 // pred_check
          %p262 = pneg %p129
        $region34: #{tpu_custom_call.1} parent=23 // pred_check_branch
          %264 = sbr.rel (%p262) target = $region36
        $region35: #{tpu_custom_call.1} parent=23 // pred_region
          %s265 = sand.u32 %s119, 1
          %s266 = scalar_lea.sflag [#allocation10], %s265
          %s267 = sand.u32 %s119, 1
          %s268 = smul.addr %s267, 256
          %s269 = scalar_lea.vmem [#allocation9], %s268
          %s270 = smul.u32 32, %s27
          %272 = vsyncadd %s266, 0
          %s273 = smul.addr %s270, 8
          %s274 = scalar_lea.hbm %s3, %s273
          %s275 = sshll.u32 %s274, 4
          %s276 = int_to_ptr.hbm [resolvable:$true] %s275
          %s277 = sshll.u32 %s269, 4
          %s278 = int_to_ptr.vmem [resolvable:$true] %s277
          %283 = dma.hbm_to_vmem [thread:$0]  %s276, 4096, %s278, %s266, 128, 128, 8
        $region36: #{tpu_custom_call.1} parent=23 // pred_fallthru
          _
      $region24: #{tpu_custom_call.1} parent=5 // pred_fallthru
        _
      %p284 = scmp.le.s32.totalorder 1, %s19
      %p285 = scmp.lt.s32.totalorder %s19, 3
      %p286 = pnand %p284, %p285
      %p287 = pneg %p286
      // Predicated region
      $region37: #{tpu_custom_call.1} parent=5 // pred_check
        _
      $region38: #{tpu_custom_call.1} parent=5 // pred_check_branch
        %289 = sbr.rel (%p286) target = $region40
      $region39: #{tpu_custom_call.1} parent=5 // pred_region
        %s290 = ssub.s32 %s19, 1
        // Predicated region
        $region41: #{tpu_custom_call.1} parent=39 // pred_check
          %p291 = pneg %p57
        $region42: #{tpu_custom_call.1} parent=39 // pred_check_branch
          %293 = sbr.rel (%p291) target = $region44
        $region43: #{tpu_custom_call.1} parent=39 // pred_region
          %295 = dma.done [#allocation4], 256
        $region44: #{tpu_custom_call.1} parent=39 // pred_fallthru
          _
        %s296 = sand.u32 %s24, 1
        %s297 = scalar_lea.sflag [#allocation7], %s296
        %s298 = sand.u32 %s70, 1
        %s299 = smul.addr %s298, 256
        %s300 = scalar_lea.vmem [#allocation6], %s299
        // Predicated region
        $region45: #{tpu_custom_call.1} parent=39 // pred_check
          %p301 = pneg %p83
        $region46: #{tpu_custom_call.1} parent=39 // pred_check_branch
          %303 = sbr.rel (%p301) target = $region48
        $region47: #{tpu_custom_call.1} parent=39 // pred_region
          %305 = dma.done %s297, 4096
        $region48: #{tpu_custom_call.1} parent=39 // pred_fallthru
          _
        %s306 = sand.u32 %s24, 1
        %s307 = scalar_lea.sflag [#allocation7], %s306
        %s308 = sand.u32 %s96, 1
        %s309 = smul.addr %s308, 2
        %s310 = scalar_lea.vmem [#allocation8], %s309
        // Predicated region
        $region49: #{tpu_custom_call.1} parent=39 // pred_check
          %p311 = pneg %p109
        $region50: #{tpu_custom_call.1} parent=39 // pred_check_branch
          %313 = sbr.rel (%p311) target = $region52
        $region51: #{tpu_custom_call.1} parent=39 // pred_region
          %315 = dma.done %s307, 32
        $region52: #{tpu_custom_call.1} parent=39 // pred_fallthru
          _
        %s316 = sand.u32 %s122, 1
        %s317 = scalar_lea.sflag [#allocation10], %s316
        %s318 = sand.u32 %s122, 1
        %s319 = smul.addr %s318, 256
        %s320 = scalar_lea.vmem [#allocation9], %s319
        // Predicated region
        $region53: #{tpu_custom_call.1} parent=39 // pred_check
          %p321 = pneg %p135
        $region54: #{tpu_custom_call.1} parent=39 // pred_check_branch
          %323 = sbr.rel (%p321) target = $region56
        $region55: #{tpu_custom_call.1} parent=39 // pred_region
          %325 = dma.done %s317, 4096
        $region56: #{tpu_custom_call.1} parent=39 // pred_fallthru
          _
        %p326 = pneg %p57
        %p327 = pneg %p54
        %s328 = sand.u32 %s24, 1
        %s329 = scalar_lea.sflag [#allocation7], %s328
        %s330 = sand.u32 %s70, 1
        %s331 = smul.addr %s330, 256
        %s332 = scalar_lea.vmem [#allocation6], %s331
        %p333 = pneg %p83
        %p334 = pneg %p80
        %s335 = sand.u32 %s24, 1
        %s336 = scalar_lea.sflag [#allocation7], %s335
        %s337 = sand.u32 %s96, 1
        %s338 = smul.addr %s337, 2
        %s339 = scalar_lea.vmem [#allocation8], %s338
        %p340 = pneg %p109
        %p341 = pneg %p106
        %s342 = sand.u32 %s122, 1
        %s343 = scalar_lea.sflag [#allocation10], %s342
        %s344 = sand.u32 %s122, 1
        %s345 = smul.addr %s344, 256
        %s346 = scalar_lea.vmem [#allocation9], %s345
        %p347 = pneg %p135
        %p348 = pneg %p132
        %p349 = pneg %p156
        %p350 = pneg %p153
        %p351 = pneg %p182
        %p352 = pneg %p179
        %s353 = smul.u32 2, %s28
        %s354 = smul.u32 2, %s29
        %s355 = smul.u32 2, %s29
        %s356 = smul.u32 32, %s29
        %s357 = smul.u32 2, %s28
        %p358 = scmp.eq.s32.totalorder %s29, 0
        // Predicated region
        $region57: #{tpu_custom_call.1} parent=39 // pred_check
          %p359 = pneg %p358
        $region58: #{tpu_custom_call.1} parent=39 // pred_check_branch
          %361 = sbr.rel (%p359) target = $region60
        $region59: #{tpu_custom_call.1} parent=39 // pred_region
          %v362 = vld [vmem:[%s4] sm:$0x1]
          %v364 = vperm.slane %v362, 0
          %366 = vst [vmem:[#allocation2] sm:$0xff] %v364
          %367 = vst [vmem:[#allocation2 + $0x8] sm:$0xff] %v364
        $region60: #{tpu_custom_call.1} parent=39 // pred_fallthru
          _
        %v368 = vld [vmem:[#allocation3] sm:$0xff]
        %v369 = vld [vmem:[#allocation3 + $0x8] sm:$0xff]
        %v370 = vld [vmem:[%s300] sm:$0xff]
        %v371 = vld [vmem:[%s300 + $0x8] sm:$0xff]
        %v372 = vld [vmem:[%s300 + $0x10] sm:$0xff]
        %v373 = vld [vmem:[%s300 + $0x18] sm:$0xff]
        %v374 = vld [vmem:[%s300 + $0x20] sm:$0xff]
        %v375 = vld [vmem:[%s300 + $0x28] sm:$0xff]
        %v376 = vld [vmem:[%s300 + $0x30] sm:$0xff]
        %v377 = vld [vmem:[%s300 + $0x38] sm:$0xff]
        %v378 = vld [vmem:[%s300 + $0x40] sm:$0xff]
        %v379 = vld [vmem:[%s300 + $0x48] sm:$0xff]
        %v380 = vld [vmem:[%s300 + $0x50] sm:$0xff]
        %v381 = vld [vmem:[%s300 + $0x58] sm:$0xff]
        %v382 = vld [vmem:[%s300 + $0x60] sm:$0xff]
        %v383 = vld [vmem:[%s300 + $0x68] sm:$0xff]
        %v384 = vld [vmem:[%s300 + $0x70] sm:$0xff]
        %v385 = vld [vmem:[%s300 + $0x78] sm:$0xff]
        %v386 = vld [vmem:[%s300 + $0x80] sm:$0xff]
        %v387 = vld [vmem:[%s300 + $0x88] sm:$0xff]
        %v388 = vld [vmem:[%s300 + $0x90] sm:$0xff]
        %v389 = vld [vmem:[%s300 + $0x98] sm:$0xff]
        %v390 = vld [vmem:[%s300 + $0xa0] sm:$0xff]
        %v391 = vld [vmem:[%s300 + $0xa8] sm:$0xff]
        %v392 = vld [vmem:[%s300 + $0xb0] sm:$0xff]
        %v393 = vld [vmem:[%s300 + $0xb8] sm:$0xff]
        %v394 = vld [vmem:[%s300 + $0xc0] sm:$0xff]
        %v395 = vld [vmem:[%s300 + $0xc8] sm:$0xff]
        %v396 = vld [vmem:[%s300 + $0xd0] sm:$0xff]
        %v397 = vld [vmem:[%s300 + $0xd8] sm:$0xff]
        %v398 = vld [vmem:[%s300 + $0xe0] sm:$0xff]
        %v399 = vld [vmem:[%s300 + $0xe8] sm:$0xff]
        %v400 = vld [vmem:[%s300 + $0xf0] sm:$0xff]
        %v401 = vld [vmem:[%s300 + $0xf8] sm:$0xff]
        %v402 = vld [vmem:[%s310] sm:$0x3]
        %v404 = vperm.slane %v402, 0
        %v405 = vperm.slane %v402, 1
        %408 = vmatpush.msra.mxu0 %v400
        %409 = vmatpush.msra.mxu0 %v398
        %410 = vmatpush.msra.mxu0 %v396
        %411 = vmatpush.msra.mxu0 %v394
        %412 = vmatpush.msra.mxu0 %v392
        %413 = vmatpush.msra.mxu0 %v390
        %414 = vmatpush.msra.mxu0 %v388
        %415 = vmatpush.msra.mxu0 %v386
        %416 = vmatpush.msra.mxu0 %v384
        %417 = vmatpush.msra.mxu0 %v382
        %418 = vmatpush.msra.mxu0 %v380
        %419 = vmatpush.msra.mxu0 %v378
        %420 = vmatpush.msra.mxu0 %v376
        %421 = vmatpush.msra.mxu0 %v374
        %422 = vmatpush.msra.mxu0 %v372
        %423 = vmatpush.msra.mxu0 %v370
        %424 = vmatmul.f32.gmra.mxu0 %v368
        %v425 = vpop.f32.mrf.mxu0
        %v426 = vadd.f32 %v404, %v425
        %427 = vmatmul.f32.gmra.mxu0 %v369
        %v428 = vpop.f32.mrf.mxu0
        %v429 = vadd.f32 %v404, %v428
        %430 = vdwg.mxu0
        %431 = vmatpush.msra.mxu0 %v401
        %432 = vmatpush.msra.mxu0 %v399
        %433 = vmatpush.msra.mxu0 %v397
        %434 = vmatpush.msra.mxu0 %v395
        %435 = vmatpush.msra.mxu0 %v393
        %436 = vmatpush.msra.mxu0 %v391
        %437 = vmatpush.msra.mxu0 %v389
        %438 = vmatpush.msra.mxu0 %v387
        %439 = vmatpush.msra.mxu0 %v385
        %440 = vmatpush.msra.mxu0 %v383
        %441 = vmatpush.msra.mxu0 %v381
        %442 = vmatpush.msra.mxu0 %v379
        %443 = vmatpush.msra.mxu0 %v377
        %444 = vmatpush.msra.mxu0 %v375
        %445 = vmatpush.msra.mxu0 %v373
        %446 = vmatpush.msra.mxu0 %v371
        %447 = vmatmul.f32.gmra.mxu0 %v368
        %v448 = vpop.f32.mrf.mxu0
        %v449 = vadd.f32 %v405, %v448
        %450 = vmatmul.f32.gmra.mxu0 %v369
        %v451 = vpop.f32.mrf.mxu0
        %v452 = vadd.f32 %v405, %v451
        %453 = vdwg.mxu0
        %v454 = vmul.f32 %v426, 0.5
        %v455 = vmul.f32 %v449, 0.5
        %v456 = vmul.f32 %v429, 0.5
        %v457 = vmul.f32 %v452, 0.5
        %v458 = vmul.f32 %v426, 0.044715
        %v459 = vmul.f32 %v449, 0.044715
        %v460 = vmul.f32 %v429, 0.044715
        %v461 = vmul.f32 %v452, 0.044715
        %v462 = vmul.f32 %v458, %v426
        %v463 = vmul.f32 %v459, %v449
        %v464 = vmul.f32 %v460, %v429
        %v465 = vmul.f32 %v461, %v452
        %v466 = vmul.f32 %v462, %v426
        %v467 = vmul.f32 %v463, %v449
        %v468 = vmul.f32 %v464, %v429
        %v469 = vmul.f32 %v465, %v452
        %v470 = vadd.f32 %v426, %v466
        %v471 = vadd.f32 %v449, %v467
        %v472 = vadd.f32 %v429, %v468
        %v473 = vadd.f32 %v452, %v469
        %v474 = vmul.f32 %v470, 0.7978846
        %v475 = vmul.f32 %v471, 0.7978846
        %v476 = vmul.f32 %v472, 0.7978846
        %v477 = vmul.f32 %v473, 0.7978846
        %v478 = vtanh.pop %v474
        %v479 = vtanh.pop %v475
        %v480 = vtanh.pop %v476
        %v481 = vtanh.pop %v477
        %v482 = vadd.f32 %v478, 1.0
        %v483 = vadd.f32 %v479, 1.0
        %v484 = vadd.f32 %v480, 1.0
        %v485 = vadd.f32 %v481, 1.0
        %v486 = vmul.f32 %v454, %v482
        %v487 = vmul.f32 %v455, %v483
        %v488 = vmul.f32 %v456, %v484
        %v489 = vmul.f32 %v457, %v485
        %v490 = vld [vmem:[#allocation2] sm:$0xff]
        %v491 = vld [vmem:[#allocation2 + $0x8] sm:$0xff]
        %v492 = vld [vmem:[%s320] sm:$0xff]
        %v493 = vld [vmem:[%s320 + $0x8] sm:$0xff]
        %v494 = vld [vmem:[%s320 + $0x10] sm:$0xff]
        %v495 = vld [vmem:[%s320 + $0x18] sm:$0xff]
        %v496 = vld [vmem:[%s320 + $0x20] sm:$0xff]
        %v497 = vld [vmem:[%s320 + $0x28] sm:$0xff]
        %v498 = vld [vmem:[%s320 + $0x30] sm:$0xff]
        %v499 = vld [vmem:[%s320 + $0x38] sm:$0xff]
        %v500 = vld [vmem:[%s320 + $0x40] sm:$0xff]
        %v501 = vld [vmem:[%s320 + $0x48] sm:$0xff]
        %v502 = vld [vmem:[%s320 + $0x50] sm:$0xff]
        %v503 = vld [vmem:[%s320 + $0x58] sm:$0xff]
        %v504 = vld [vmem:[%s320 + $0x60] sm:$0xff]
        %v505 = vld [vmem:[%s320 + $0x68] sm:$0xff]
        %v506 = vld [vmem:[%s320 + $0x70] sm:$0xff]
        %v507 = vld [vmem:[%s320 + $0x78] sm:$0xff]
        %v508 = vld [vmem:[%s320 + $0x80] sm:$0xff]
        %v509 = vld [vmem:[%s320 + $0x88] sm:$0xff]
        %v510 = vld [vmem:[%s320 + $0x90] sm:$0xff]
        %v511 = vld [vmem:[%s320 + $0x98] sm:$0xff]
        %v512 = vld [vmem:[%s320 + $0xa0] sm:$0xff]
        %v513 = vld [vmem:[%s320 + $0xa8] sm:$0xff]
        %v514 = vld [vmem:[%s320 + $0xb0] sm:$0xff]
        %v515 = vld [vmem:[%s320 + $0xb8] sm:$0xff]
        %v516 = vld [vmem:[%s320 + $0xc0] sm:$0xff]
        %v517 = vld [vmem:[%s320 + $0xc8] sm:$0xff]
        %v518 = vld [vmem:[%s320 + $0xd0] sm:$0xff]
        %v519 = vld [vmem:[%s320 + $0xd8] sm:$0xff]
        %v520 = vld [vmem:[%s320 + $0xe0] sm:$0xff]
        %v521 = vld [vmem:[%s320 + $0xe8] sm:$0xff]
        %v522 = vld [vmem:[%s320 + $0xf0] sm:$0xff]
        %v523 = vld [vmem:[%s320 + $0xf8] sm:$0xff]
        %524 = vmatpush.msra.mxu0 %v507
        %525 = vmatpush.msra.mxu0 %v506
        %526 = vmatpush.msra.mxu0 %v505
        %527 = vmatpush.msra.mxu0 %v504
        %528 = vmatpush.msra.mxu0 %v503
        %529 = vmatpush.msra.mxu0 %v502
        %530 = vmatpush.msra.mxu0 %v501
        %531 = vmatpush.msra.mxu0 %v500
        %532 = vmatpush.msra.mxu0 %v499
        %533 = vmatpush.msra.mxu0 %v498
        %534 = vmatpush.msra.mxu0 %v497
        %535 = vmatpush.msra.mxu0 %v496
        %536 = vmatpush.msra.mxu0 %v495
        %537 = vmatpush.msra.mxu0 %v494
        %538 = vmatpush.msra.mxu0 %v493
        %539 = vmatpush.msra.mxu0 %v492
        %540 = vmatmul.f32.gmra.mxu0 %v486
        %v541 = vpop.f32.mrf.mxu0
        %v542 = vadd.f32 0.0, %v541
        %543 = vmatmul.f32.gmra.mxu0 %v488
        %v544 = vpop.f32.mrf.mxu0
        %v545 = vadd.f32 0.0, %v544
        %546 = vdwg.mxu0
        %547 = vmatpush.msra.mxu0 %v523
        %548 = vmatpush.msra.mxu0 %v522
        %549 = vmatpush.msra.mxu0 %v521
        %550 = vmatpush.msra.mxu0 %v520
        %551 = vmatpush.msra.mxu0 %v519
        %552 = vmatpush.msra.mxu0 %v518
        %553 = vmatpush.msra.mxu0 %v517
        %554 = vmatpush.msra.mxu0 %v516
        %555 = vmatpush.msra.mxu0 %v515
        %556 = vmatpush.msra.mxu0 %v514
        %557 = vmatpush.msra.mxu0 %v513
        %558 = vmatpush.msra.mxu0 %v512
        %559 = vmatpush.msra.mxu0 %v511
        %560 = vmatpush.msra.mxu0 %v510
        %561 = vmatpush.msra.mxu0 %v509
        %562 = vmatpush.msra.mxu0 %v508
        %563 = vmatmul.f32.gmra.mxu0 %v487
        %v564 = vpop.f32.mrf.mxu0
        %v565 = vadd.f32 %v542, %v564
        %566 = vmatmul.f32.gmra.mxu0 %v489
        %v567 = vpop.f32.mrf.mxu0
        %v568 = vadd.f32 %v545, %v567
        %569 = vdwg.mxu0
        %v570 = vadd.f32 %v490, %v565
        %v571 = vadd.f32 %v491, %v568
        %572 = vst [vmem:[#allocation2] sm:$0xff] %v570
        %573 = vst [vmem:[#allocation2 + $0x8] sm:$0xff] %v571
        %p574 = scmp.eq.s32.totalorder %s29, 1
        // Predicated region
        $region61: #{tpu_custom_call.1} parent=39 // pred_check
          %p575 = pneg %p574
        $region62: #{tpu_custom_call.1} parent=39 // pred_check_branch
          %577 = sbr.rel (%p575) target = $region64
        $region63: #{tpu_custom_call.1} parent=39 // pred_region
          %v578 = vld [vmem:[#allocation2] sm:$0xff]
          %v579 = vld [vmem:[#allocation2 + $0x8] sm:$0xff]
          %580 = vst [vmem:[#allocation11] sm:$0xff] %v578
          %581 = vst [vmem:[#allocation11 + $0x8] sm:$0xff] %v579
        $region64: #{tpu_custom_call.1} parent=39 // pred_fallthru
          _
        // Predicated region
        $region65: #{tpu_custom_call.1} parent=39 // pred_check
          %p582 = pneg %p179
        $region66: #{tpu_custom_call.1} parent=39 // pred_check_branch
          %584 = sbr.rel (%p582) target = $region68
        $region67: #{tpu_custom_call.1} parent=39 // pred_region
          %s585 = smul.u32 2, %s28
          %587 = vsyncadd [#allocation5], 0
          %s588 = smul.addr %s585, 8
          %s589 = scalar_lea.hbm %s5, %s588
          %s590 = sshll.u32 [#allocation11], 4
          %s591 = int_to_ptr.vmem [resolvable:$true] %s590
          %s592 = sshll.u32 %s589, 4
          %s593 = int_to_ptr.hbm [resolvable:$true] %s592
          %598 = dma.vmem_to_hbm [thread:$0]  %s591, 256, %s593, [#allocation5], 128, 128, 8
        $region68: #{tpu_custom_call.1} parent=39 // pred_fallthru
          _
        // Predicated region
        $region69: #{tpu_custom_call.1} parent=39 // pred_check
          %p599 = pneg %p179
        $region70: #{tpu_custom_call.1} parent=39 // pred_check_branch
          %601 = sbr.rel (%p599) target = $region72
        $region71: #{tpu_custom_call.1} parent=39 // pred_region
          %603 = dma.done [#allocation5], 256
        $region72: #{tpu_custom_call.1} parent=39 // pred_fallthru
          _
      $region40: #{tpu_custom_call.1} parent=5 // pred_fallthru
        _
      %p604 = scmp.le.s32.totalorder 2, %s19
      // Predicated region
      $region73: #{tpu_custom_call.1} parent=5 // pred_check
        %p605 = pneg %p604
      $region74: #{tpu_custom_call.1} parent=5 // pred_check_branch
        %607 = sbr.rel (%p605) target = $region76
      $region75: #{tpu_custom_call.1} parent=5 // pred_region
        %s608 = ssub.s32 %s19, 2
      $region76: #{tpu_custom_call.1} parent=5 // pred_fallthru
        _
    $region6: #{tpu_custom_call.1} parent=1 // loop_footer
      %s23 = sadd.s32 1, %s19
    $region7: #{tpu_custom_call.1} parent=1 // loop_footer_branch
      %18 = sbr.rel target = $region3
    $region8: #{tpu_custom_call.1} parent=1 // loop_exit
      _
    %609 = vsyncpa [#allocation4], 1
    %s610 = scalar_lea.sflag [#allocation4], 1
    %611 = vsyncpa %s610, 1
    %612 = vsyncpa [#allocation7], 1
    %s613 = scalar_lea.sflag [#allocation7], 1
    %614 = vsyncpa %s613, 1
    %615 = vsyncpa [#allocation10], 1
    %s616 = scalar_lea.sflag [#allocation10], 1
    %617 = vsyncpa %s616, 1
    %618 = vsyncpa [#allocation5], 1
    %s619 = scalar_lea.sflag [#allocation5], 1
    %620 = vsyncpa %s619, 1

</llo_original>
